<compile_context>
chip_gen: v7x
topology: tpu7x:2x2x1
jax: 0.10.0
libtpu: 0.0.40
codegen_flags: <defaults>
</compile_context>

<pallas_src>
import math

import jax
import jax.numpy as jnp
from jax.experimental import pallas as pl
from jax.experimental.pallas import tpu as pltpu


def _round_up(x, m):
    return (x + m - 1) // m * m


def predictor_kernel(x_ref, w_ref, m_ref, out_ref):
    # x_ref: (tm, D) f32, w_ref: (D, T_pad) bf16, m_ref: (tm, 1) f32,
    # out_ref: (tm, T) f32  (T <= T_pad; padded weight columns are discarded
    # before the store, so no padded bytes ever reach HBM).
    t = out_ref.shape[-1]
    x_bf = x_ref[...].astype(jnp.bfloat16)                     # in-kernel cast (VPU)
    y = jnp.dot(x_bf, w_ref[...], preferred_element_type=jnp.float32)
    out_ref[...] = (y[:, :t] * m_ref[...]).astype(out_ref.dtype)


def predictor_forward(data, weight_t, non_pad_mask, *, max_rows_per_tile=2048):
    """data: [B,S,D] f32, weight_t: [D,T] f32 (= linear.weight.T),
    non_pad_mask: [B,S,1] float.  Returns [B,S,T] in data.dtype."""
    B, S, D = data.shape
    T = weight_t.shape[1]
    M = B * S

    # Lane-dense MXU RHS: pad weight columns up to a multiple of 128 (VMEM
    # only — the padded columns never reach the output HBM stream).
    T_pad = _round_up(T, 128)

    # Row tile: multiple of 16 (bf16 sublane packing); align to 128 rows when
    # large enough so MXU LHS tiles are full.
    tm = min(max_rows_per_tile, _round_up(M, 16))
    if tm >= 128:
        tm = (tm // 128) * 128
    else:
        tm = _round_up(tm, 16)

    def vmem_bytes(t):
        # Everything (x f32, mask f32, out f32, weight bf16) double-buffered
        # by the pipeline.
        return 2 * (t * D * 4 + t * 4 + t * T * 4 + D * T_pad * 2)

    # 12 MiB budget: safely under v5e's 16 MiB scoped-VMEM default (v6e/v7x
    # defaults are 32 MiB, so no override needed on any generation).
    while tm > 16 and vmem_bytes(tm) > 12 * 1024 * 1024:
        tm = _round_up(max(16, tm // 2), 16)

    M_pad = _round_up(M, tm)

    # Flatten and pad rows (padded rows are zero; sliced off below).
    x = data.reshape(M, D)
    m = non_pad_mask.reshape(M, 1).astype(jnp.float32)
    if M_pad != M:
        x = jnp.pad(x, ((0, M_pad - M), (0, 0)))
        m = jnp.pad(m, ((0, M_pad - M), (0, 0)))

    # Constant parameter: pad + cast once (would be cached across calls in a
    # real model).
    w_bf = weight_t.astype(jnp.bfloat16)
    if T_pad != T:
        w_bf = jnp.pad(w_bf, ((0, 0), (0, T_pad - T)))

    out = pl.pallas_call(
        predictor_kernel,
        out_shape=jax.ShapeDtypeStruct((M_pad, T), jnp.float32),
        grid_spec=pltpu.PrefetchScalarGridSpec(
            num_scalar_prefetch=0,
            grid=(M_pad // tm,),
            in_specs=[
                pl.BlockSpec((tm, D), lambda i: (i, 0)),        # activations, f32
                pl.BlockSpec((D, T_pad), lambda i: (0, 0)),     # resident weight, bf16
                pl.BlockSpec((tm, 1), lambda i: (i, 0)),        # mask, f32
            ],
            out_specs=pl.BlockSpec((tm, T), lambda i: (i, 0)),  # only T real columns
        ),
        compiler_params=pltpu.CompilerParams(
            dimension_semantics=("parallel",),
        ),
    )(x, w_bf, m)

    if M_pad != M:
        out = out[:M]
    return out.reshape(B, S, T).astype(data.dtype)


if __name__ == "__main__":
    # Small shapes consistent with the module: batch=2, seq=8, dim=32, num_types=16
    B, S, D, T = 2, 8, 32, 16

    key = jax.random.PRNGKey(0)
    k_data, k_w, _ = jax.random.split(key, 3)

    data = jax.random.normal(k_data, (B, S, D), dtype=jnp.float32)

    # Deterministic Xavier-normal init of nn.Linear(dim, num_types, bias=False).weight
    # PyTorch weight shape is [T, D]; xavier std = sqrt(2 / (fan_in + fan_out)).
    std = math.sqrt(2.0 / (D + T))
    weight = std * jax.random.normal(k_w, (T, D), dtype=jnp.float32)   # [T, D]
    weight_t = weight.T                                                # [D, T]

    # non_pad_mask: [B, S, 1] float mask (1.0 for valid positions, 0.0 padding)
    lengths = jnp.array([S, S - 3], dtype=jnp.int32)                   # deterministic
    pos = jnp.arange(S)[None, :]                                       # [1, S]
    non_pad_mask = (pos < lengths[:, None]).astype(jnp.float32)[..., None]  # [B,S,1]

    out = predictor_forward(data, weight_t, non_pad_mask)
    out = jax.block_until_ready(out)

    # Reference checks.
    assert out.shape == (B, S, T)

    # 1) Exact match against a bf16-emulated reference (same math as the kernel).
    ref_bf = (
        data.astype(jnp.bfloat16).astype(jnp.float32)
        @ weight_t.astype(jnp.bfloat16).astype(jnp.float32)
    ) * non_pad_mask
    assert jnp.allclose(out, ref_bf, atol=1e-5, rtol=1e-5)

    # 2) Loose match against the full-f32 reference (bf16 rounding only).
    #    TODO(synk): if exact f32 matmul numerics are required downstream,
    #    switch the in-kernel cast to an f32 dot (perf is unchanged; mem-bound).
    ref_f32 = (data @ weight_t) * non_pad_mask
    assert jnp.allclose(out, ref_f32, atol=3e-2, rtol=3e-2)

    print("KERNEL_OK")
</pallas_src>

<mosaic_0001>
module attributes {stable_mosaic.version = 11 : i64} {
  func.func @predictor_kernel(%arg0: i32, %arg1: memref<16x32xf32, #tpu.memory_space<vmem>>, %arg2: memref<32x128xbf16, #tpu.memory_space<vmem>>, %arg3: memref<16x1xf32, #tpu.memory_space<vmem>>, %arg4: memref<16x16xf32, #tpu.memory_space<vmem>>) attributes {dimension_semantics = [#tpu.dimension_semantics<parallel>], iteration_bounds = array<i64: 1>, scalar_prefetch = 0 : i64, scratch_operands = 0 : i64, tpu.core_type = #tpu.core_type<tc>, window_params = [{transform_indices = @transform_0, window_bounds = array<i64: 16, 32>}, {pipeline_mode = #tpu.pipeline_mode<synchronous>, transform_indices = @transform_1, window_bounds = array<i64: 32, 128>}, {transform_indices = @transform_2, window_bounds = array<i64: 16, 1>}, {transform_indices = @transform_3, window_bounds = array<i64: 16, 16>}]} {
    %c0 = arith.constant 0 : index
    %c0_0 = arith.constant 0 : index
    %0 = vector.load %arg1[%c0, %c0_0] : memref<16x32xf32, #tpu.memory_space<vmem>>, vector<16x32xf32>
    %1 = arith.truncf %0 : vector<16x32xf32> to vector<16x32xbf16>
    %c0_1 = arith.constant 0 : index
    %c0_2 = arith.constant 0 : index
    %2 = vector.load %arg2[%c0_1, %c0_2] : memref<32x128xbf16, #tpu.memory_space<vmem>>, vector<32x128xbf16>
    %cst = arith.constant dense<0.000000e+00> : vector<16x128xf32>
    %3 = tpu.matmul %1, %2, %cst {dimension_numbers = #tpu.dot_dimension_numbers<[1], [0], [0], [1], [0, 0, 1, 1], [], []>} : vector<16x32xbf16>, vector<32x128xbf16>, vector<16x128xf32> -> vector<16x128xf32>
    %4 = vector.extract_strided_slice %3 {offsets = [0, 0], sizes = [16, 16], strides = [1, 1]} : vector<16x128xf32> to vector<16x16xf32>
    %c0_3 = arith.constant 0 : index
    %c0_4 = arith.constant 0 : index
    %5 = vector.load %arg3[%c0_3, %c0_4] : memref<16x1xf32, #tpu.memory_space<vmem>>, vector<16x1xf32>
    %6 = vector.broadcast %5 : vector<16x1xf32> to vector<16x16xf32>
    %7 = arith.mulf %4, %6 : vector<16x16xf32>
    %c0_5 = arith.constant 0 : index
    %c0_6 = arith.constant 0 : index
    %8 = vector.load %arg4[%c0_5, %c0_6] : memref<16x16xf32, #tpu.memory_space<vmem>>, vector<16x16xf32>
    tpu.vector_store %arg4[%c0_5, %c0_6], %7 {strides = array<i32>} : memref<16x16xf32, #tpu.memory_space<vmem>>, vector<16x16xf32>,
    return
  }
  func.func @transform_0(%arg0: i32) -> (i32, i32) {
    %c0_i32 = arith.constant 0 : i32
    %c0_i32_0 = arith.constant 0 : i32
    return %arg0, %c0_i32 : i32, i32
  }
  func.func @transform_1(%arg0: i32) -> (i32, i32) {
    %c0_i32 = arith.constant 0 : i32
    %c0_i32_0 = arith.constant 0 : i32
    %c0_i32_1 = arith.constant 0 : i32
    return %c0_i32, %c0_i32_0 : i32, i32
  }
  func.func @transform_2(%arg0: i32) -> (i32, i32) {
    %c0_i32 = arith.constant 0 : i32
    %c0_i32_0 = arith.constant 0 : i32
    return %arg0, %c0_i32 : i32, i32
  }
  func.func @transform_3(%arg0: i32) -> (i32, i32) {
    %c0_i32 = arith.constant 0 : i32
    %c0_i32_0 = arith.constant 0 : i32
    return %arg0, %c0_i32 : i32, i32
  }
}

</mosaic_0001>

<llo_original>
// kernel: tpu_custom_call.1
$region0: #{tpu_custom_call.1}
  #allocation0 [shape = 'u32[]', space=smem, size = 0x4, offset = 0x4, fixed_abs, tag = 'smem constant byte address 0x4 - core index']
  #allocation1 [shape = 'u32[144,128]{1,0:T(1,128)}', space=vmem, size = 0x12000, scoped, tag = 'internal scratch']
  %s0 = inlined_call_operand.vmem [shape: f32[16,32], index: 0, kind: input, shape index: {}]
  %s1 = inlined_call_operand.hbm [shape: bf16[32,128], index: 1, kind: input, shape index: {}]
  %s2 = inlined_call_operand.vmem [shape: f32[16,1], index: 2, kind: input, shape index: {}]
  %s3 = inlined_call_operand.hbm [shape: f32[16,16], index: 3, kind: output, shape index: {}]
  %s4 = sld [smem:[#allocation0]]
  $region26: #{tpu_custom_call.1} parent=0
    _
  %s6 = ssub.s32 1, %s4
  %s7 = scalar_select 0, %s6, %s4
  $region1: #{tpu_custom_call.1} parent=0
    #allocation2 [shape = 'u8[8192]{0}', space=vmem, size = 0x2000, scoped, tag = 'input window, operand 1, single buffered']
    #allocation3 [shape = 's32[1]{0}', space=sflag, size = 0x4, scoped, tag = 'scoped memory for tpu_custom_call.1']
    #allocation4 [shape = 's32[1]{0}', space=sflag, size = 0x4, scoped, tag = 'scoped memory for tpu_custom_call.1']
    #allocation5 [shape = 'u8[8192]{0}', space=vmem, size = 0x2000, scoped, tag = 'output window, operand 0, single buffered']
    %8 = vsyncpa [#allocation3], 0
    %9 = vsyncpa [#allocation4], 0
    // Predicated region
    $region2: #{tpu_custom_call.1} parent=1 // pred_check
      _
    $region3: #{tpu_custom_call.1} parent=1 // pred_check_branch
      %11 = sbr.rel (0) target = $region5
    $region4: #{tpu_custom_call.1} parent=1 // pred_region
      _
    $region5: #{tpu_custom_call.1} parent=1 // pred_fallthru
      _
    // Predicated region
    $region6: #{tpu_custom_call.1} parent=1 // pred_check
      _
    $region7: #{tpu_custom_call.1} parent=1 // pred_check_branch
      %13 = sbr.rel (0) target = $region9
    $region8: #{tpu_custom_call.1} parent=1 // pred_region
      %s15 = ssub.s32 256, 256
      %16 = vsyncadd [#allocation3], %s15
      %s17 = sshll.u32 [#allocation2], 4
      %s18 = int_to_ptr.vmem [resolvable:$true] %s17
      %23 = dma.hbm_to_vmem [thread:$0]  %s1, 256, %s18, [#allocation3], 64, 64, 4
    $region9: #{tpu_custom_call.1} parent=1 // pred_fallthru
      _
    // Predicated region
    $region10: #{tpu_custom_call.1} parent=1 // pred_check
      _
    $region11: #{tpu_custom_call.1} parent=1 // pred_check_branch
      %25 = sbr.rel (0) target = $region13
    $region12: #{tpu_custom_call.1} parent=1 // pred_region
      _
    $region13: #{tpu_custom_call.1} parent=1 // pred_fallthru
      _
    // Predicated region
    $region14: #{tpu_custom_call.1} parent=1 // pred_check
      _
    $region15: #{tpu_custom_call.1} parent=1 // pred_check_branch
      %27 = sbr.rel (0) target = $region17
    $region16: #{tpu_custom_call.1} parent=1 // pred_region
      %28 = dma.done [#allocation3], 256
    $region17: #{tpu_custom_call.1} parent=1 // pred_fallthru
      _
    %v30 = vld [vmem:[%s0] sm:$0xff]
    %v31 = vld [vmem:[%s0 + $0x8] sm:$0xff]
    %v32 = vpack.c.bf16 %v31, %v30
    %v33 = vld [vmem:[#allocation2] sm:$0xf]
    %v34 = vld [vmem:[#allocation2 + $0x4] sm:$0xf]
    %v35 = vld [vmem:[#allocation2 + $0x8] sm:$0xf]
    %v36 = vld [vmem:[#allocation2 + $0xc] sm:$0xf]
    %v41 = vunpack.c.l.b16 %v33
    %v42 = vunpack.c.l.b16 %v34
    %v43 = vunpack.c.l.b16 %v35
    %v44 = vunpack.c.l.b16 %v36
    %v45 = vpack.c.b16 %v42, %v41
    %v46 = vpack.c.b16 %v44, %v43
    %vm49 = vcmask 261120
    %v51 = vsel %vm49, %v32, 0
    %53 = vmatprep.subr.bf16.mxu0 0
    %54 = vmatpush1.bf16.msra.mxu0 %v45
    %55 = vmatprep.subr.bf16.mxu0 0
    %56 = vmatpush1.bf16.msra.mxu0 %v46
    %57 = vmatprep.subr.bf16.mxu0 0
    %58 = vmatpush1.bf16.msra.mxu0 0
    %59 = vmatprep.subr.bf16.mxu0 0
    %60 = vmatpush1.bf16.msra.mxu0 0
    %61 = vmatprep.subr.bf16.mxu0 0
    %62 = vmatpush1.bf16.msra.mxu0 0
    %63 = vmatprep.subr.bf16.mxu0 0
    %64 = vmatpush1.bf16.msra.mxu0 0
    %65 = vmatprep.subr.bf16.mxu0 0
    %66 = vmatpush1.bf16.msra.mxu0 0
    %67 = vmatprep.subr.bf16.mxu0 0
    %68 = vmatpush1.bf16.msra.mxu0 0
    %69 = vmatprep.subr.bf16.mxu0 0
    %70 = vmatpush1.bf16.msra.mxu0 0
    %71 = vmatprep.subr.bf16.mxu0 0
    %72 = vmatpush1.bf16.msra.mxu0 0
    %73 = vmatprep.subr.bf16.mxu0 0
    %74 = vmatpush1.bf16.msra.mxu0 0
    %75 = vmatprep.subr.bf16.mxu0 0
    %76 = vmatpush1.bf16.msra.mxu0 0
    %77 = vmatprep.subr.bf16.mxu0 0
    %78 = vmatpush1.bf16.msra.mxu0 0
    %79 = vmatprep.subr.bf16.mxu0 0
    %80 = vmatpush1.bf16.msra.mxu0 0
    %81 = vmatprep.subr.bf16.mxu0 0
    %82 = vmatpush1.bf16.msra.mxu0 0
    %83 = vmatprep.subr.bf16.mxu0 0
    %84 = vmatpush1.bf16.msra.mxu0 0
    %85 = vmatprep.mubr.bf16.mxu0 0
    %86 = vmatmul.mubr.bf16.gmra.mrb[0].mxu0 %v51
    %v87 = vpop.f32.mrb[0].mxu0
    %v88 = vadd.f32 0.0, %v87
    %v89 = vpop.f32.mrb[0].mxu0
    %v90 = vpop.f32.mrb[0].mxu0
    %v91 = vadd.f32 0.0, %v90
    %v92 = vpop.f32.mrb[0].mxu0
    %93 = vdwg.mxu0
    %v94 = vld [vmem:[%s2] sm:$0xff]
    %v95 = vld [vmem:[%s2 + $0x8] sm:$0xff]
    %97 = vset.pattern.permute.xlu0 0
    %98 = vperm.xlu0 %97, %v94
    %v99 = vpop.permute.xlu0 %98
    %102 = vset.pattern.permute.xlu0 0
    %103 = vperm.xlu0 %102, %v95
    %v104 = vpop.permute.xlu0 %103
    %v106 = vmul.f32 %v88, %v99
    %v107 = vmul.f32 %v91, %v104
    %vm108 = vcmask 130048
    %109 = vst.msk [vmem:[#allocation5] sm:$0xff] %vm108, %v106
    %110 = vst.msk [vmem:[#allocation5 + $0x8] sm:$0xff] %vm108, %v107
    // Predicated region
    $region18: #{tpu_custom_call.1} parent=1 // pred_check
      _
    $region19: #{tpu_custom_call.1} parent=1 // pred_check_branch
      %112 = sbr.rel (0) target = $region21
    $region20: #{tpu_custom_call.1} parent=1 // pred_region
      %s114 = ssub.s32 256, 256
      %115 = vsyncadd [#allocation4], %s114
      %s116 = sshll.u32 [#allocation5], 4
      %s117 = int_to_ptr.vmem [resolvable:$true] %s116
      %122 = dma.vmem_to_hbm [thread:$0]  %s117, 256, %s3, [#allocation4], 128, 128, 8
    $region21: #{tpu_custom_call.1} parent=1 // pred_fallthru
      _
    // Predicated region
    $region22: #{tpu_custom_call.1} parent=1 // pred_check
      _
    $region23: #{tpu_custom_call.1} parent=1 // pred_check_branch
      %124 = sbr.rel (0) target = $region25
    $region24: #{tpu_custom_call.1} parent=1 // pred_region
      %125 = dma.done [#allocation4], 256
    $region25: #{tpu_custom_call.1} parent=1 // pred_fallthru
      _
    %126 = vsyncpa [#allocation3], 1
    %127 = vsyncpa [#allocation4], 1

</llo_original>
